<compile_context>
chip_gen: v5e
topology: v5e:2x2
jax: 0.10.0
libtpu: 0.0.40
codegen_flags: <defaults>
</compile_context>

<pallas_src>
import jax
import jax.numpy as jnp
from jax import lax
from jax.experimental import pallas as pl
from jax.experimental.pallas import tpu as pltpu

H, W, CIN, COUT = 7, 7, 128, 32
HW = H * W                      # 49 pixels (lane axis)
KH = KW = 3
PADL = 8                        # left zero-lane margin: every tap shift stays in-bounds
YW = 128                        # lane-padded width of the matmul RHS (one lane group)
EPS = 1e-5


def bn_relu_conv_kernel(x_ref, gb_ref, w_ref, o_ref):
    # x_ref : (CIN, HW)      f32  -- native NCHW view (channels on sublanes, pixels on lanes)
    # gb_ref: (CIN, 2)       f32  -- column 0 = gamma, column 1 = beta
    # w_ref : (9*COUT, CIN)  bf16 -- rows [t*COUT:(t+1)*COUT] hold tap t = kh*3 + kw
    # o_ref : (COUT, HW)     f32  -- channel-major == NCHW-compatible output
    x = x_ref[...]
    inv_n = 1.0 / float(HW)

    # --- BatchNorm (training-mode batch stats), two-pass variance (no cancellation) ---
    mean = jnp.sum(x, axis=1, keepdims=True) * inv_n            # (CIN, 1)
    xc = x - mean
    var = jnp.sum(xc * xc, axis=1, keepdims=True) * inv_n       # (CIN, 1), >= 0 by construction
    scale = gb_ref[:, 0:1] * lax.rsqrt(var + EPS)               # gamma / sqrt(var + eps)
    y = jnp.maximum(xc * scale + gb_ref[:, 1:2], 0.0)           # affine + ReLU
    y = y.astype(jnp.bfloat16)                                  # MXU operand dtype (f32 accum below)

    # Embed the 49 pixels at lanes [PADL, PADL+HW) of a 128-lane zero slab: zeros
    # propagate through the matmul, so vertically out-of-image taps are free.
    y128 = jnp.concatenate(
        [jnp.zeros((CIN, PADL), jnp.bfloat16), y,
         jnp.zeros((CIN, YW - PADL - HW), jnp.bfloat16)], axis=1)       # (CIN, 128)

    # Horizontal-boundary masks (iota + equality chain; no vector modulo needed).
    col = lax.broadcasted_iota(jnp.int32, (1, HW), 1)
    valid_l = col != 0                      # ow != 0  (for kw = 0 taps)
    valid_r = col != (W - 1)                # ow != 6  (for kw = 2 taps)
    for r in range(1, H):
        valid_l = valid_l & (col != r * W)
        valid_r = valid_r & (col != r * W + W - 1)

    # --- 3x3 conv: one (96,CIN)x(CIN,128) bf16 matmul per kh-group, then three
    #     aligned 32-row tap slices with static lane shifts, accumulated in f32. ---
    acc = None
    for kh in range(KH):
        pk = jnp.dot(w_ref[kh * KW * COUT:(kh + 1) * KW * COUT, :], y128,
                     preferred_element_type=jnp.float32)        # (3*COUT, 128) f32
        for kw in range(KW):
            s = (kh - 1) * W + (kw - 1)                         # lane shift in [-8, 8]
            tap = pk[kw * COUT:(kw + 1) * COUT, PADL + s:PADL + s + HW]  # (COUT, HW)
            if kw == 0:
                tap = jnp.where(valid_l, tap, 0.0)
            elif kw == KW - 1:
                tap = jnp.where(valid_r, tap, 0.0)
            acc = tap if acc is None else acc + tap
    o_ref[...] = acc


def prepare_conv_weight(w_oihw):
    # OIHW (32,128,3,3) -> (9*COUT, CIN); rows [t*32:(t+1)*32] hold tap t = kh*3+kw.
    # Done once outside the hot path; bf16 is the native MXU input dtype.
    return jnp.transpose(w_oihw, (2, 3, 0, 1)).reshape(KH * KW * COUT, CIN).astype(jnp.bfloat16)


def prepare_bn_params(gamma, beta):
    # Coalesce the two tiny per-channel vectors into a single (CIN, 2) operand
    # (one DMA descriptor instead of two); hoisted out of the hot path.
    return jnp.stack([gamma, beta], axis=1).astype(jnp.float32)


@jax.jit
def bn_relu_conv(x_nchw, gb, w_fused):
    # Zero layout glue: (1,CIN,7,7) -> (CIN,49) and (COUT,49) -> (1,COUT,7,7) are
    # contiguous reshapes (bitcasts), so the pallas_call is the only real TPU kernel.
    x2d = x_nchw.reshape(CIN, HW)
    out = pl.pallas_call(
        bn_relu_conv_kernel,
        out_shape=jax.ShapeDtypeStruct((COUT, HW), jnp.float32),
        in_specs=[pl.BlockSpec(memory_space=pltpu.MemorySpace.VMEM)] * 3,
        out_specs=pl.BlockSpec(memory_space=pltpu.MemorySpace.VMEM),
    )(x2d, gb, w_fused)
    return out.reshape(1, COUT, H, W)
    # TODO(synk): if this block is invoked for many feature maps, add a leading
    # "parallel" grid axis over images to amortize launch cost / use both v7x TCs.


def reference(x, gamma, beta, w):
    mean = x.mean(axis=(0, 2, 3), keepdims=True)
    var = ((x - mean) ** 2).mean(axis=(0, 2, 3), keepdims=True)
    y = (x - mean) / jnp.sqrt(var + EPS) * gamma.reshape(1, -1, 1, 1) \
        + beta.reshape(1, -1, 1, 1)
    y = jnp.maximum(y, 0.0)
    return lax.conv_general_dilated(y, w, (1, 1), ((1, 1), (1, 1)),
                                    dimension_numbers=('NCHW', 'OIHW', 'NCHW'),
                                    precision=lax.Precision.HIGHEST)


if __name__ == "__main__":
    key = jax.random.PRNGKey(0)
    k1, k2, k3, k4 = jax.random.split(key, 4)
    # Shapes from the module: x [1,128,7,7], BN(128), Conv2d(128->32, 3x3, pad 1, no bias)
    x = jax.random.normal(k1, (1, CIN, H, W), jnp.float32)
    gamma = 1.0 + 0.1 * jax.random.normal(k2, (CIN,), jnp.float32)
    beta = 0.1 * jax.random.normal(k3, (CIN,), jnp.float32)
    w = jax.random.normal(k4, (COUT, CIN, 3, 3), jnp.float32) / (3 * 3 * CIN) ** 0.5

    w_fused = prepare_conv_weight(w)        # hoisted out of the hot path
    gb = prepare_bn_params(gamma, beta)     # hoisted out of the hot path

    out = jax.block_until_ready(bn_relu_conv(x, gb, w_fused))
    assert out.shape == (1, COUT, H, W), out.shape

    ref = reference(x, gamma, beta, w)
    err = float(jnp.max(jnp.abs(out - ref)))
    # bf16 MXU operands with f32 accumulation vs. f32 HIGHEST-precision reference.
    assert jnp.allclose(out, ref, atol=1e-2, rtol=1e-2), err

    print("KERNEL_OK")
</pallas_src>

<mosaic_0001>
module attributes {stable_mosaic.version = 11 : i64} {
  func.func @bn_relu_conv_kernel(%arg0: memref<128x49xf32, #tpu.memory_space<vmem>>, %arg1: memref<128x2xf32, #tpu.memory_space<vmem>>, %arg2: memref<288x128xbf16, #tpu.memory_space<vmem>>, %arg3: memref<32x49xf32, #tpu.memory_space<vmem>>) attributes {dimension_semantics = [], scalar_prefetch = 0 : i64, scratch_operands = 0 : i64, tpu.core_type = #tpu.core_type<tc>} {
    %c0 = arith.constant 0 : index
    %c0_0 = arith.constant 0 : index
    %0 = vector.load %arg0[%c0, %c0_0] : memref<128x49xf32, #tpu.memory_space<vmem>>, vector<128x49xf32>
    %cst = arith.constant dense<0.000000e+00> : vector<128xf32>
    %1 = vector.multi_reduction <add>, %0, %cst [1] : vector<128x49xf32> to vector<128xf32>
    %2 = vector.shape_cast %1 : vector<128xf32> to vector<128x1xf32>
    %cst_1 = arith.constant 0.0204081628 : f32
    %3 = vector.broadcast %cst_1 : f32 to vector<128x1xf32>
    %4 = arith.mulf %2, %3 : vector<128x1xf32>
    %5 = vector.broadcast %4 : vector<128x1xf32> to vector<128x49xf32>
    %6 = arith.subf %0, %5 : vector<128x49xf32>
    %7 = arith.mulf %6, %6 : vector<128x49xf32>
    %cst_2 = arith.constant dense<0.000000e+00> : vector<128xf32>
    %8 = vector.multi_reduction <add>, %7, %cst_2 [1] : vector<128x49xf32> to vector<128xf32>
    %9 = vector.shape_cast %8 : vector<128xf32> to vector<128x1xf32>
    %cst_3 = arith.constant 0.0204081628 : f32
    %10 = vector.broadcast %cst_3 : f32 to vector<128x1xf32>
    %11 = arith.mulf %9, %10 : vector<128x1xf32>
    %c0_4 = arith.constant 0 : index
    %c0_5 = arith.constant 0 : index
    %12 = vector.load %arg1[%c0_4, %c0_5] : memref<128x2xf32, #tpu.memory_space<vmem>>, vector<128x1xf32>
    %cst_6 = arith.constant 9.99999974E-6 : f32
    %13 = vector.broadcast %cst_6 : f32 to vector<128x1xf32>
    %14 = arith.addf %11, %13 : vector<128x1xf32>
    %15 = math.rsqrt %14 : vector<128x1xf32>
    %16 = arith.mulf %12, %15 : vector<128x1xf32>
    %17 = vector.broadcast %16 : vector<128x1xf32> to vector<128x49xf32>
    %18 = arith.mulf %6, %17 : vector<128x49xf32>
    %c0_7 = arith.constant 0 : index
    %c1 = arith.constant 1 : index
    %19 = vector.load %arg1[%c0_7, %c1] : memref<128x2xf32, #tpu.memory_space<vmem>>, vector<128x1xf32>
    %20 = vector.broadcast %19 : vector<128x1xf32> to vector<128x49xf32>
    %21 = arith.addf %18, %20 : vector<128x49xf32>
    %cst_8 = arith.constant 0.000000e+00 : f32
    %22 = vector.broadcast %cst_8 : f32 to vector<128x49xf32>
    %23 = arith.maximumf %21, %22 : vector<128x49xf32>
    %24 = arith.truncf %23 : vector<128x49xf32> to vector<128x49xbf16>
    %cst_9 = arith.constant 0.000000e+00 : bf16
    %25 = vector.broadcast %cst_9 : bf16 to vector<128x8xbf16>
    %cst_10 = arith.constant 0.000000e+00 : bf16
    %26 = vector.broadcast %cst_10 : bf16 to vector<128x71xbf16>
    %27 = tpu.concatenate %25, %24, %26 in 1 : vector<128x8xbf16>, vector<128x49xbf16>, vector<128x71xbf16> -> vector<128x128xbf16>
    %28 = tpu.iota {dimensions = array<i32: 1>} : vector<1x49xi32>
    %c0_i32 = arith.constant 0 : i32
    %29 = vector.broadcast %c0_i32 : i32 to vector<1x49xi32>
    %30 = arith.cmpi ne, %28, %29 : vector<1x49xi32>
    %c6_i32 = arith.constant 6 : i32
    %31 = vector.broadcast %c6_i32 : i32 to vector<1x49xi32>
    %32 = arith.cmpi ne, %28, %31 : vector<1x49xi32>
    %c7_i32 = arith.constant 7 : i32
    %33 = vector.broadcast %c7_i32 : i32 to vector<1x49xi32>
    %34 = arith.cmpi ne, %28, %33 : vector<1x49xi32>
    %35 = arith.andi %30, %34 : vector<1x49xi1>
    %c13_i32 = arith.constant 13 : i32
    %36 = vector.broadcast %c13_i32 : i32 to vector<1x49xi32>
    %37 = arith.cmpi ne, %28, %36 : vector<1x49xi32>
    %38 = arith.andi %32, %37 : vector<1x49xi1>
    %c14_i32 = arith.constant 14 : i32
    %39 = vector.broadcast %c14_i32 : i32 to vector<1x49xi32>
    %40 = arith.cmpi ne, %28, %39 : vector<1x49xi32>
    %41 = arith.andi %35, %40 : vector<1x49xi1>
    %c20_i32 = arith.constant 20 : i32
    %42 = vector.broadcast %c20_i32 : i32 to vector<1x49xi32>
    %43 = arith.cmpi ne, %28, %42 : vector<1x49xi32>
    %44 = arith.andi %38, %43 : vector<1x49xi1>
    %c21_i32 = arith.constant 21 : i32
    %45 = vector.broadcast %c21_i32 : i32 to vector<1x49xi32>
    %46 = arith.cmpi ne, %28, %45 : vector<1x49xi32>
    %47 = arith.andi %41, %46 : vector<1x49xi1>
    %c27_i32 = arith.constant 27 : i32
    %48 = vector.broadcast %c27_i32 : i32 to vector<1x49xi32>
    %49 = arith.cmpi ne, %28, %48 : vector<1x49xi32>
    %50 = arith.andi %44, %49 : vector<1x49xi1>
    %c28_i32 = arith.constant 28 : i32
    %51 = vector.broadcast %c28_i32 : i32 to vector<1x49xi32>
    %52 = arith.cmpi ne, %28, %51 : vector<1x49xi32>
    %53 = arith.andi %47, %52 : vector<1x49xi1>
    %c34_i32 = arith.constant 34 : i32
    %54 = vector.broadcast %c34_i32 : i32 to vector<1x49xi32>
    %55 = arith.cmpi ne, %28, %54 : vector<1x49xi32>
    %56 = arith.andi %50, %55 : vector<1x49xi1>
    %c35_i32 = arith.constant 35 : i32
    %57 = vector.broadcast %c35_i32 : i32 to vector<1x49xi32>
    %58 = arith.cmpi ne, %28, %57 : vector<1x49xi32>
    %59 = arith.andi %53, %58 : vector<1x49xi1>
    %c41_i32 = arith.constant 41 : i32
    %60 = vector.broadcast %c41_i32 : i32 to vector<1x49xi32>
    %61 = arith.cmpi ne, %28, %60 : vector<1x49xi32>
    %62 = arith.andi %56, %61 : vector<1x49xi1>
    %c42_i32 = arith.constant 42 : i32
    %63 = vector.broadcast %c42_i32 : i32 to vector<1x49xi32>
    %64 = arith.cmpi ne, %28, %63 : vector<1x49xi32>
    %65 = arith.andi %59, %64 : vector<1x49xi1>
    %c48_i32 = arith.constant 48 : i32
    %66 = vector.broadcast %c48_i32 : i32 to vector<1x49xi32>
    %67 = arith.cmpi ne, %28, %66 : vector<1x49xi32>
    %68 = arith.andi %62, %67 : vector<1x49xi1>
    %c0_11 = arith.constant 0 : index
    %c0_12 = arith.constant 0 : index
    %69 = vector.load %arg2[%c0_11, %c0_12] : memref<288x128xbf16, #tpu.memory_space<vmem>>, vector<96x128xbf16>
    %cst_13 = arith.constant dense<0.000000e+00> : vector<96x128xf32>
    %70 = tpu.matmul %69, %27, %cst_13 {dimension_numbers = #tpu.dot_dimension_numbers<[1], [0], [0], [1], [0, 0, 1, 1], [], []>} : vector<96x128xbf16>, vector<128x128xbf16>, vector<96x128xf32> -> vector<96x128xf32>
    %71 = vector.extract_strided_slice %70 {offsets = [0, 0], sizes = [32, 49], strides = [1, 1]} : vector<96x128xf32> to vector<32x49xf32>
    %cst_14 = arith.constant 0.000000e+00 : f32
    %72 = vector.shape_cast %65 : vector<1x49xi1> to vector<1x49xi1>
    %73 = vector.broadcast %72 : vector<1x49xi1> to vector<32x49xi1>
    %74 = vector.broadcast %cst_14 : f32 to vector<32x49xf32>
    %75 = arith.select %73, %71, %74 : vector<32x49xi1>, vector<32x49xf32>
    %76 = vector.extract_strided_slice %70 {offsets = [32, 1], sizes = [32, 49], strides = [1, 1]} : vector<96x128xf32> to vector<32x49xf32>
    %77 = arith.addf %75, %76 : vector<32x49xf32>
    %78 = vector.extract_strided_slice %70 {offsets = [64, 2], sizes = [32, 49], strides = [1, 1]} : vector<96x128xf32> to vector<32x49xf32>
    %cst_15 = arith.constant 0.000000e+00 : f32
    %79 = vector.shape_cast %68 : vector<1x49xi1> to vector<1x49xi1>
    %80 = vector.broadcast %79 : vector<1x49xi1> to vector<32x49xi1>
    %81 = vector.broadcast %cst_15 : f32 to vector<32x49xf32>
    %82 = arith.select %80, %78, %81 : vector<32x49xi1>, vector<32x49xf32>
    %83 = arith.addf %77, %82 : vector<32x49xf32>
    %c96 = arith.constant 96 : index
    %c0_16 = arith.constant 0 : index
    %84 = vector.load %arg2[%c96, %c0_16] : memref<288x128xbf16, #tpu.memory_space<vmem>>, vector<96x128xbf16>
    %cst_17 = arith.constant dense<0.000000e+00> : vector<96x128xf32>
    %85 = tpu.matmul %84, %27, %cst_17 {dimension_numbers = #tpu.dot_dimension_numbers<[1], [0], [0], [1], [0, 0, 1, 1], [], []>} : vector<96x128xbf16>, vector<128x128xbf16>, vector<96x128xf32> -> vector<96x128xf32>
    %86 = vector.extract_strided_slice %85 {offsets = [0, 7], sizes = [32, 49], strides = [1, 1]} : vector<96x128xf32> to vector<32x49xf32>
    %cst_18 = arith.constant 0.000000e+00 : f32
    %87 = vector.shape_cast %65 : vector<1x49xi1> to vector<1x49xi1>
    %88 = vector.broadcast %87 : vector<1x49xi1> to vector<32x49xi1>
    %89 = vector.broadcast %cst_18 : f32 to vector<32x49xf32>
    %90 = arith.select %88, %86, %89 : vector<32x49xi1>, vector<32x49xf32>
    %91 = arith.addf %83, %90 : vector<32x49xf32>
    %92 = vector.extract_strided_slice %85 {offsets = [32, 8], sizes = [32, 49], strides = [1, 1]} : vector<96x128xf32> to vector<32x49xf32>
    %93 = arith.addf %91, %92 : vector<32x49xf32>
    %94 = vector.extract_strided_slice %85 {offsets = [64, 9], sizes = [32, 49], strides = [1, 1]} : vector<96x128xf32> to vector<32x49xf32>
    %cst_19 = arith.constant 0.000000e+00 : f32
    %95 = vector.shape_cast %68 : vector<1x49xi1> to vector<1x49xi1>
    %96 = vector.broadcast %95 : vector<1x49xi1> to vector<32x49xi1>
    %97 = vector.broadcast %cst_19 : f32 to vector<32x49xf32>
    %98 = arith.select %96, %94, %97 : vector<32x49xi1>, vector<32x49xf32>
    %99 = arith.addf %93, %98 : vector<32x49xf32>
    %c192 = arith.constant 192 : index
    %c0_20 = arith.constant 0 : index
    %100 = vector.load %arg2[%c192, %c0_20] : memref<288x128xbf16, #tpu.memory_space<vmem>>, vector<96x128xbf16>
    %cst_21 = arith.constant dense<0.000000e+00> : vector<96x128xf32>
    %101 = tpu.matmul %100, %27, %cst_21 {dimension_numbers = #tpu.dot_dimension_numbers<[1], [0], [0], [1], [0, 0, 1, 1], [], []>} : vector<96x128xbf16>, vector<128x128xbf16>, vector<96x128xf32> -> vector<96x128xf32>
    %102 = vector.extract_strided_slice %101 {offsets = [0, 14], sizes = [32, 49], strides = [1, 1]} : vector<96x128xf32> to vector<32x49xf32>
    %cst_22 = arith.constant 0.000000e+00 : f32
    %103 = vector.shape_cast %65 : vector<1x49xi1> to vector<1x49xi1>
    %104 = vector.broadcast %103 : vector<1x49xi1> to vector<32x49xi1>
    %105 = vector.broadcast %cst_22 : f32 to vector<32x49xf32>
    %106 = arith.select %104, %102, %105 : vector<32x49xi1>, vector<32x49xf32>
    %107 = arith.addf %99, %106 : vector<32x49xf32>
    %108 = vector.extract_strided_slice %101 {offsets = [32, 15], sizes = [32, 49], strides = [1, 1]} : vector<96x128xf32> to vector<32x49xf32>
    %109 = arith.addf %107, %108 : vector<32x49xf32>
    %110 = vector.extract_strided_slice %101 {offsets = [64, 16], sizes = [32, 49], strides = [1, 1]} : vector<96x128xf32> to vector<32x49xf32>
    %cst_23 = arith.constant 0.000000e+00 : f32
    %111 = vector.shape_cast %68 : vector<1x49xi1> to vector<1x49xi1>
    %112 = vector.broadcast %111 : vector<1x49xi1> to vector<32x49xi1>
    %113 = vector.broadcast %cst_23 : f32 to vector<32x49xf32>
    %114 = arith.select %112, %110, %113 : vector<32x49xi1>, vector<32x49xf32>
    %115 = arith.addf %109, %114 : vector<32x49xf32>
    %c0_24 = arith.constant 0 : index
    %c0_25 = arith.constant 0 : index
    %116 = vector.load %arg3[%c0_24, %c0_25] : memref<32x49xf32, #tpu.memory_space<vmem>>, vector<32x49xf32>
    tpu.vector_store %arg3[%c0_24, %c0_25], %115 {strides = array<i32>} : memref<32x49xf32, #tpu.memory_space<vmem>>, vector<32x49xf32>,
    return
  }
}

</mosaic_0001>

<llo_original>
// kernel: bn_relu_conv.1
$region0: #{bn_relu_conv.1}
  #allocation0 [shape = 'u32[]', space=smem, size = 0x4, offset = 0x4, fixed_abs, tag = 'smem constant byte address 0x4 - core index']
  #allocation1 [shape = 'u32[72,128]{1,0:T(1,128)}', space=vmem, size = 0x9000, scoped, tag = 'internal scratch']
  %s0 = inlined_call_operand.vmem [shape: f32[128,49], index: 0, kind: input, shape index: {}]
  %s1 = inlined_call_operand.vmem [shape: f32[128,2], index: 1, kind: input, shape index: {}]
  %s2 = inlined_call_operand.vmem [shape: bf16[288,128], index: 2, kind: input, shape index: {}]
  %s3 = inlined_call_operand.vmem [shape: f32[32,49], index: 3, kind: output, shape index: {}]
  %s4 = sld [smem:[#allocation0]]
  $region22: #{bn_relu_conv.1} parent=0
    _
  %s6 = ssub.s32 1, %s4
  %s7 = scalar_select 0, %s6, %s4
  // Predicated region
  $region2: #{bn_relu_conv.1} parent=0 // pred_check
    _
  $region3: #{bn_relu_conv.1} parent=0 // pred_check_branch
    %9 = sbr.rel (0) target = $region5
  $region4: #{bn_relu_conv.1} parent=0 // pred_region
    _
  $region5: #{bn_relu_conv.1} parent=0 // pred_fallthru
    _
  // Predicated region
  $region6: #{bn_relu_conv.1} parent=0 // pred_check
    _
  $region7: #{bn_relu_conv.1} parent=0 // pred_check_branch
    %11 = sbr.rel (0) target = $region9
  $region8: #{bn_relu_conv.1} parent=0 // pred_region
    _
  $region9: #{bn_relu_conv.1} parent=0 // pred_fallthru
    _
  // Predicated region
  $region10: #{bn_relu_conv.1} parent=0 // pred_check
    _
  $region11: #{bn_relu_conv.1} parent=0 // pred_check_branch
    %13 = sbr.rel (0) target = $region13
  $region12: #{bn_relu_conv.1} parent=0 // pred_region
    _
  $region13: #{bn_relu_conv.1} parent=0 // pred_fallthru
    _
  %v15 = vld [vmem:[%s0] sm:$0xff]
  %v16 = vld [vmem:[%s0 + $0x8] sm:$0xff]
  %v17 = vld [vmem:[%s0 + $0x10] sm:$0xff]
  %v18 = vld [vmem:[%s0 + $0x18] sm:$0xff]
  %v19 = vld [vmem:[%s0 + $0x20] sm:$0xff]
  %v20 = vld [vmem:[%s0 + $0x28] sm:$0xff]
  %v21 = vld [vmem:[%s0 + $0x30] sm:$0xff]
  %v22 = vld [vmem:[%s0 + $0x38] sm:$0xff]
  %v23 = vld [vmem:[%s0 + $0x40] sm:$0xff]
  %v24 = vld [vmem:[%s0 + $0x48] sm:$0xff]
  %v25 = vld [vmem:[%s0 + $0x50] sm:$0xff]
  %v26 = vld [vmem:[%s0 + $0x58] sm:$0xff]
  %v27 = vld [vmem:[%s0 + $0x60] sm:$0xff]
  %v28 = vld [vmem:[%s0 + $0x68] sm:$0xff]
  %v29 = vld [vmem:[%s0 + $0x70] sm:$0xff]
  %v30 = vld [vmem:[%s0 + $0x78] sm:$0xff]
  %vm31 = vcmask 400384
  %v32 = vsel %vm31, %v15, 0.0
  %33 = vadd.xlane.f32.xlu0 %v32
  %v34 = vpop.xlane.xlu0 %33
  %v35 = vsel %vm31, %v16, 0.0
  %36 = vadd.xlane.f32.xlu0 %v35
  %v37 = vpop.xlane.xlu0 %36
  %v38 = vsel %vm31, %v17, 0.0
  %39 = vadd.xlane.f32.xlu0 %v38
  %v40 = vpop.xlane.xlu0 %39
  %v41 = vsel %vm31, %v18, 0.0
  %42 = vadd.xlane.f32.xlu0 %v41
  %v43 = vpop.xlane.xlu0 %42
  %v44 = vsel %vm31, %v19, 0.0
  %45 = vadd.xlane.f32.xlu0 %v44
  %v46 = vpop.xlane.xlu0 %45
  %v47 = vsel %vm31, %v20, 0.0
  %48 = vadd.xlane.f32.xlu0 %v47
  %v49 = vpop.xlane.xlu0 %48
  %v50 = vsel %vm31, %v21, 0.0
  %51 = vadd.xlane.f32.xlu0 %v50
  %v52 = vpop.xlane.xlu0 %51
  %v53 = vsel %vm31, %v22, 0.0
  %54 = vadd.xlane.f32.xlu0 %v53
  %v55 = vpop.xlane.xlu0 %54
  %v56 = vsel %vm31, %v23, 0.0
  %57 = vadd.xlane.f32.xlu0 %v56
  %v58 = vpop.xlane.xlu0 %57
  %v59 = vsel %vm31, %v24, 0.0
  %60 = vadd.xlane.f32.xlu0 %v59
  %v61 = vpop.xlane.xlu0 %60
  %v62 = vsel %vm31, %v25, 0.0
  %63 = vadd.xlane.f32.xlu0 %v62
  %v64 = vpop.xlane.xlu0 %63
  %v65 = vsel %vm31, %v26, 0.0
  %66 = vadd.xlane.f32.xlu0 %v65
  %v67 = vpop.xlane.xlu0 %66
  %v68 = vsel %vm31, %v27, 0.0
  %69 = vadd.xlane.f32.xlu0 %v68
  %v70 = vpop.xlane.xlu0 %69
  %v71 = vsel %vm31, %v28, 0.0
  %72 = vadd.xlane.f32.xlu0 %v71
  %v73 = vpop.xlane.xlu0 %72
  %v74 = vsel %vm31, %v29, 0.0
  %75 = vadd.xlane.f32.xlu0 %v74
  %v76 = vpop.xlane.xlu0 %75
  %v77 = vsel %vm31, %v30, 0.0
  %78 = vadd.xlane.f32.xlu0 %v77
  %v79 = vpop.xlane.xlu0 %78
  %v80 = vmul.f32 %v34, 0.020408163
  %v81 = vmul.f32 %v37, 0.020408163
  %v82 = vmul.f32 %v40, 0.020408163
  %v83 = vmul.f32 %v43, 0.020408163
  %v84 = vmul.f32 %v46, 0.020408163
  %v85 = vmul.f32 %v49, 0.020408163
  %v86 = vmul.f32 %v52, 0.020408163
  %v87 = vmul.f32 %v55, 0.020408163
  %v88 = vmul.f32 %v58, 0.020408163
  %v89 = vmul.f32 %v61, 0.020408163
  %v90 = vmul.f32 %v64, 0.020408163
  %v91 = vmul.f32 %v67, 0.020408163
  %v92 = vmul.f32 %v70, 0.020408163
  %v93 = vmul.f32 %v73, 0.020408163
  %v94 = vmul.f32 %v76, 0.020408163
  %v95 = vmul.f32 %v79, 0.020408163
  %v96 = vsub.f32 %v15, %v80
  %v97 = vsub.f32 %v16, %v81
  %v98 = vsub.f32 %v17, %v82
  %v99 = vsub.f32 %v18, %v83
  %v100 = vsub.f32 %v19, %v84
  %v101 = vsub.f32 %v20, %v85
  %v102 = vsub.f32 %v21, %v86
  %v103 = vsub.f32 %v22, %v87
  %v104 = vsub.f32 %v23, %v88
  %v105 = vsub.f32 %v24, %v89
  %v106 = vsub.f32 %v25, %v90
  %v107 = vsub.f32 %v26, %v91
  %v108 = vsub.f32 %v27, %v92
  %v109 = vsub.f32 %v28, %v93
  %v110 = vsub.f32 %v29, %v94
  %v111 = vsub.f32 %v30, %v95
  %v112 = vmul.f32 %v96, %v96
  %v113 = vmul.f32 %v97, %v97
  %v114 = vmul.f32 %v98, %v98
  %v115 = vmul.f32 %v99, %v99
  %v116 = vmul.f32 %v100, %v100
  %v117 = vmul.f32 %v101, %v101
  %v118 = vmul.f32 %v102, %v102
  %v119 = vmul.f32 %v103, %v103
  %v120 = vmul.f32 %v104, %v104
  %v121 = vmul.f32 %v105, %v105
  %v122 = vmul.f32 %v106, %v106
  %v123 = vmul.f32 %v107, %v107
  %v124 = vmul.f32 %v108, %v108
  %v125 = vmul.f32 %v109, %v109
  %v126 = vmul.f32 %v110, %v110
  %v127 = vmul.f32 %v111, %v111
  %v128 = vsel %vm31, %v112, 0.0
  %129 = vadd.xlane.f32.xlu0 %v128
  %v130 = vpop.xlane.xlu0 %129
  %v131 = vsel %vm31, %v113, 0.0
  %132 = vadd.xlane.f32.xlu0 %v131
  %v133 = vpop.xlane.xlu0 %132
  %v134 = vsel %vm31, %v114, 0.0
  %135 = vadd.xlane.f32.xlu0 %v134
  %v136 = vpop.xlane.xlu0 %135
  %v137 = vsel %vm31, %v115, 0.0
  %138 = vadd.xlane.f32.xlu0 %v137
  %v139 = vpop.xlane.xlu0 %138
  %v140 = vsel %vm31, %v116, 0.0
  %141 = vadd.xlane.f32.xlu0 %v140
  %v142 = vpop.xlane.xlu0 %141
  %v143 = vsel %vm31, %v117, 0.0
  %144 = vadd.xlane.f32.xlu0 %v143
  %v145 = vpop.xlane.xlu0 %144
  %v146 = vsel %vm31, %v118, 0.0
  %147 = vadd.xlane.f32.xlu0 %v146
  %v148 = vpop.xlane.xlu0 %147
  %v149 = vsel %vm31, %v119, 0.0
  %150 = vadd.xlane.f32.xlu0 %v149
  %v151 = vpop.xlane.xlu0 %150
  %v152 = vsel %vm31, %v120, 0.0
  %153 = vadd.xlane.f32.xlu0 %v152
  %v154 = vpop.xlane.xlu0 %153
  %v155 = vsel %vm31, %v121, 0.0
  %156 = vadd.xlane.f32.xlu0 %v155
  %v157 = vpop.xlane.xlu0 %156
  %v158 = vsel %vm31, %v122, 0.0
  %159 = vadd.xlane.f32.xlu0 %v158
  %v160 = vpop.xlane.xlu0 %159
  %v161 = vsel %vm31, %v123, 0.0
  %162 = vadd.xlane.f32.xlu0 %v161
  %v163 = vpop.xlane.xlu0 %162
  %v164 = vsel %vm31, %v124, 0.0
  %165 = vadd.xlane.f32.xlu0 %v164
  %v166 = vpop.xlane.xlu0 %165
  %v167 = vsel %vm31, %v125, 0.0
  %168 = vadd.xlane.f32.xlu0 %v167
  %v169 = vpop.xlane.xlu0 %168
  %v170 = vsel %vm31, %v126, 0.0
  %171 = vadd.xlane.f32.xlu0 %v170
  %v172 = vpop.xlane.xlu0 %171
  %v173 = vsel %vm31, %v127, 0.0
  %174 = vadd.xlane.f32.xlu0 %v173
  %v175 = vpop.xlane.xlu0 %174
  %v176 = vmul.f32 %v130, 0.020408163
  %v177 = vmul.f32 %v133, 0.020408163
  %v178 = vmul.f32 %v136, 0.020408163
  %v179 = vmul.f32 %v139, 0.020408163
  %v180 = vmul.f32 %v142, 0.020408163
  %v181 = vmul.f32 %v145, 0.020408163
  %v182 = vmul.f32 %v148, 0.020408163
  %v183 = vmul.f32 %v151, 0.020408163
  %v184 = vmul.f32 %v154, 0.020408163
  %v185 = vmul.f32 %v157, 0.020408163
  %v186 = vmul.f32 %v160, 0.020408163
  %v187 = vmul.f32 %v163, 0.020408163
  %v188 = vmul.f32 %v166, 0.020408163
  %v189 = vmul.f32 %v169, 0.020408163
  %v190 = vmul.f32 %v172, 0.020408163
  %v191 = vmul.f32 %v175, 0.020408163
  %v192 = vld [vmem:[%s1] sm:$0xff]
  %v193 = vld [vmem:[%s1 + $0x8] sm:$0xff]
  %v194 = vld [vmem:[%s1 + $0x10] sm:$0xff]
  %v195 = vld [vmem:[%s1 + $0x18] sm:$0xff]
  %v196 = vld [vmem:[%s1 + $0x20] sm:$0xff]
  %v197 = vld [vmem:[%s1 + $0x28] sm:$0xff]
  %v198 = vld [vmem:[%s1 + $0x30] sm:$0xff]
  %v199 = vld [vmem:[%s1 + $0x38] sm:$0xff]
  %v200 = vld [vmem:[%s1 + $0x40] sm:$0xff]
  %v201 = vld [vmem:[%s1 + $0x48] sm:$0xff]
  %v202 = vld [vmem:[%s1 + $0x50] sm:$0xff]
  %v203 = vld [vmem:[%s1 + $0x58] sm:$0xff]
  %v204 = vld [vmem:[%s1 + $0x60] sm:$0xff]
  %v205 = vld [vmem:[%s1 + $0x68] sm:$0xff]
  %v206 = vld [vmem:[%s1 + $0x70] sm:$0xff]
  %v207 = vld [vmem:[%s1 + $0x78] sm:$0xff]
  %v208 = vadd.f32 %v176, 1e-05
  %v209 = vadd.f32 %v177, 1e-05
  %v210 = vadd.f32 %v178, 1e-05
  %v211 = vadd.f32 %v179, 1e-05
  %v212 = vadd.f32 %v180, 1e-05
  %v213 = vadd.f32 %v181, 1e-05
  %v214 = vadd.f32 %v182, 1e-05
  %v215 = vadd.f32 %v183, 1e-05
  %v216 = vadd.f32 %v184, 1e-05
  %v217 = vadd.f32 %v185, 1e-05
  %v218 = vadd.f32 %v186, 1e-05
  %v219 = vadd.f32 %v187, 1e-05
  %v220 = vadd.f32 %v188, 1e-05
  %v221 = vadd.f32 %v189, 1e-05
  %v222 = vadd.f32 %v190, 1e-05
  %v223 = vadd.f32 %v191, 1e-05
  %v224 = vrsqrt.pop %v208
  %v225 = vmul.f32 %v224, %v208
  %v226 = vmul.f32 %v225, %v224
  %v227 = vmul.f32 0.5, %v226
  %v228 = vsub.f32 1.5, %v227
  %v229 = vmul.f32 %v224, %v228
  %vm230 = vweird.f32 %v208
  %vm231 = vweird.f32 %v224
  %vm232 = vmor %vm230, %vm231
  %v233 = vsel %vm232, %v224, %v229
  %v234 = vrsqrt.pop %v209
  %v235 = vmul.f32 %v234, %v209
  %v236 = vmul.f32 %v235, %v234
  %v237 = vmul.f32 0.5, %v236
  %v238 = vsub.f32 1.5, %v237
  %v239 = vmul.f32 %v234, %v238
  %vm240 = vweird.f32 %v209
  %vm241 = vweird.f32 %v234
  %vm242 = vmor %vm240, %vm241
  %v243 = vsel %vm242, %v234, %v239
  %v244 = vrsqrt.pop %v210
  %v245 = vmul.f32 %v244, %v210
  %v246 = vmul.f32 %v245, %v244
  %v247 = vmul.f32 0.5, %v246
  %v248 = vsub.f32 1.5, %v247
  %v249 = vmul.f32 %v244, %v248
  %vm250 = vweird.f32 %v210
  %vm251 = vweird.f32 %v244
  %vm252 = vmor %vm250, %vm251
  %v253 = vsel %vm252, %v244, %v249
  %v254 = vrsqrt.pop %v211
  %v255 = vmul.f32 %v254, %v211
  %v256 = vmul.f32 %v255, %v254
  %v257 = vmul.f32 0.5, %v256
  %v258 = vsub.f32 1.5, %v257
  %v259 = vmul.f32 %v254, %v258
  %vm260 = vweird.f32 %v211
  %vm261 = vweird.f32 %v254
  %vm262 = vmor %vm260, %vm261
  %v263 = vsel %vm262, %v254, %v259
  %v264 = vrsqrt.pop %v212
  %v265 = vmul.f32 %v264, %v212
  %v266 = vmul.f32 %v265, %v264
  %v267 = vmul.f32 0.5, %v266
  %v268 = vsub.f32 1.5, %v267
  %v269 = vmul.f32 %v264, %v268
  %vm270 = vweird.f32 %v212
  %vm271 = vweird.f32 %v264
  %vm272 = vmor %vm270, %vm271
  %v273 = vsel %vm272, %v264, %v269
  %v274 = vrsqrt.pop %v213
  %v275 = vmul.f32 %v274, %v213
  %v276 = vmul.f32 %v275, %v274
  %v277 = vmul.f32 0.5, %v276
  %v278 = vsub.f32 1.5, %v277
  %v279 = vmul.f32 %v274, %v278
  %vm280 = vweird.f32 %v213
  %vm281 = vweird.f32 %v274
  %vm282 = vmor %vm280, %vm281
  %v283 = vsel %vm282, %v274, %v279
  %v284 = vrsqrt.pop %v214
  %v285 = vmul.f32 %v284, %v214
  %v286 = vmul.f32 %v285, %v284
  %v287 = vmul.f32 0.5, %v286
  %v288 = vsub.f32 1.5, %v287
  %v289 = vmul.f32 %v284, %v288
  %vm290 = vweird.f32 %v214
  %vm291 = vweird.f32 %v284
  %vm292 = vmor %vm290, %vm291
  %v293 = vsel %vm292, %v284, %v289
  %v294 = vrsqrt.pop %v215
  %v295 = vmul.f32 %v294, %v215
  %v296 = vmul.f32 %v295, %v294
  %v297 = vmul.f32 0.5, %v296
  %v298 = vsub.f32 1.5, %v297
  %v299 = vmul.f32 %v294, %v298
  %vm300 = vweird.f32 %v215
  %vm301 = vweird.f32 %v294
  %vm302 = vmor %vm300, %vm301
  %v303 = vsel %vm302, %v294, %v299
  %v304 = vrsqrt.pop %v216
  %v305 = vmul.f32 %v304, %v216
  %v306 = vmul.f32 %v305, %v304
  %v307 = vmul.f32 0.5, %v306
  %v308 = vsub.f32 1.5, %v307
  %v309 = vmul.f32 %v304, %v308
  %vm310 = vweird.f32 %v216
  %vm311 = vweird.f32 %v304
  %vm312 = vmor %vm310, %vm311
  %v313 = vsel %vm312, %v304, %v309
  %v314 = vrsqrt.pop %v217
  %v315 = vmul.f32 %v314, %v217
  %v316 = vmul.f32 %v315, %v314
  %v317 = vmul.f32 0.5, %v316
  %v318 = vsub.f32 1.5, %v317
  %v319 = vmul.f32 %v314, %v318
  %vm320 = vweird.f32 %v217
  %vm321 = vweird.f32 %v314
  %vm322 = vmor %vm320, %vm321
  %v323 = vsel %vm322, %v314, %v319
  %v324 = vrsqrt.pop %v218
  %v325 = vmul.f32 %v324, %v218
  %v326 = vmul.f32 %v325, %v324
  %v327 = vmul.f32 0.5, %v326
  %v328 = vsub.f32 1.5, %v327
  %v329 = vmul.f32 %v324, %v328
  %vm330 = vweird.f32 %v218
  %vm331 = vweird.f32 %v324
  %vm332 = vmor %vm330, %vm331
  %v333 = vsel %vm332, %v324, %v329
  %v334 = vrsqrt.pop %v219
  %v335 = vmul.f32 %v334, %v219
  %v336 = vmul.f32 %v335, %v334
  %v337 = vmul.f32 0.5, %v336
  %v338 = vsub.f32 1.5, %v337
  %v339 = vmul.f32 %v334, %v338
  %vm340 = vweird.f32 %v219
  %vm341 = vweird.f32 %v334
  %vm342 = vmor %vm340, %vm341
  %v343 = vsel %vm342, %v334, %v339
  %v344 = vrsqrt.pop %v220
  %v345 = vmul.f32 %v344, %v220
  %v346 = vmul.f32 %v345, %v344
  %v347 = vmul.f32 0.5, %v346
  %v348 = vsub.f32 1.5, %v347
  %v349 = vmul.f32 %v344, %v348
  %vm350 = vweird.f32 %v220
  %vm351 = vweird.f32 %v344
  %vm352 = vmor %vm350, %vm351
  %v353 = vsel %vm352, %v344, %v349
  %v354 = vrsqrt.pop %v221
  %v355 = vmul.f32 %v354, %v221
  %v356 = vmul.f32 %v355, %v354
  %v357 = vmul.f32 0.5, %v356
  %v358 = vsub.f32 1.5, %v357
  %v359 = vmul.f32 %v354, %v358
  %vm360 = vweird.f32 %v221
  %vm361 = vweird.f32 %v354
  %vm362 = vmor %vm360, %vm361
  %v363 = vsel %vm362, %v354, %v359
  %v364 = vrsqrt.pop %v222
  %v365 = vmul.f32 %v364, %v222
  %v366 = vmul.f32 %v365, %v364
  %v367 = vmul.f32 0.5, %v366
  %v368 = vsub.f32 1.5, %v367
  %v369 = vmul.f32 %v364, %v368
  %vm370 = vweird.f32 %v222
  %vm371 = vweird.f32 %v364
  %vm372 = vmor %vm370, %vm371
  %v373 = vsel %vm372, %v364, %v369
  %v374 = vrsqrt.pop %v223
  %v375 = vmul.f32 %v374, %v223
  %v376 = vmul.f32 %v375, %v374
  %v377 = vmul.f32 0.5, %v376
  %v378 = vsub.f32 1.5, %v377
  %v379 = vmul.f32 %v374, %v378
  %vm380 = vweird.f32 %v223
  %vm381 = vweird.f32 %v374
  %vm382 = vmor %vm380, %vm381
  %v383 = vsel %vm382, %v374, %v379
  %v384 = vmul.f32 %v192, %v233
  %v385 = vmul.f32 %v193, %v243
  %v386 = vmul.f32 %v194, %v253
  %v387 = vmul.f32 %v195, %v263
  %v388 = vmul.f32 %v196, %v273
  %v389 = vmul.f32 %v197, %v283
  %v390 = vmul.f32 %v198, %v293
  %v391 = vmul.f32 %v199, %v303
  %v392 = vmul.f32 %v200, %v313
  %v393 = vmul.f32 %v201, %v323
  %v394 = vmul.f32 %v202, %v333
  %v395 = vmul.f32 %v203, %v343
  %v396 = vmul.f32 %v204, %v353
  %v397 = vmul.f32 %v205, %v363
  %v398 = vmul.f32 %v206, %v373
  %v399 = vmul.f32 %v207, %v383
  %401 = vset.pattern.permute.xlu0 0
  %402 = vperm.xlu0 %401, %v384
  %v403 = vpop.permute.xlu0 %402
  %406 = vset.pattern.permute.xlu0 0
  %407 = vperm.xlu0 %406, %v385
  %v408 = vpop.permute.xlu0 %407
  %411 = vset.pattern.permute.xlu0 0
  %412 = vperm.xlu0 %411, %v386
  %v413 = vpop.permute.xlu0 %412
  %416 = vset.pattern.permute.xlu0 0
  %417 = vperm.xlu0 %416, %v387
  %v418 = vpop.permute.xlu0 %417
  %421 = vset.pattern.permute.xlu0 0
  %422 = vperm.xlu0 %421, %v388
  %v423 = vpop.permute.xlu0 %422
  %426 = vset.pattern.permute.xlu0 0
  %427 = vperm.xlu0 %426, %v389
  %v428 = vpop.permute.xlu0 %427
  %431 = vset.pattern.permute.xlu0 0
  %432 = vperm.xlu0 %431, %v390
  %v433 = vpop.permute.xlu0 %432
  %436 = vset.pattern.permute.xlu0 0
  %437 = vperm.xlu0 %436, %v391
  %v438 = vpop.permute.xlu0 %437
  %441 = vset.pattern.permute.xlu0 0
  %442 = vperm.xlu0 %441, %v392
  %v443 = vpop.permute.xlu0 %442
  %446 = vset.pattern.permute.xlu0 0
  %447 = vperm.xlu0 %446, %v393
  %v448 = vpop.permute.xlu0 %447
  %451 = vset.pattern.permute.xlu0 0
  %452 = vperm.xlu0 %451, %v394
  %v453 = vpop.permute.xlu0 %452
  %456 = vset.pattern.permute.xlu0 0
  %457 = vperm.xlu0 %456, %v395
  %v458 = vpop.permute.xlu0 %457
  %461 = vset.pattern.permute.xlu0 0
  %462 = vperm.xlu0 %461, %v396
  %v463 = vpop.permute.xlu0 %462
  %466 = vset.pattern.permute.xlu0 0
  %467 = vperm.xlu0 %466, %v397
  %v468 = vpop.permute.xlu0 %467
  %471 = vset.pattern.permute.xlu0 0
  %472 = vperm.xlu0 %471, %v398
  %v473 = vpop.permute.xlu0 %472
  %476 = vset.pattern.permute.xlu0 0
  %477 = vperm.xlu0 %476, %v399
  %v478 = vpop.permute.xlu0 %477
  %v480 = vmul.f32 %v96, %v403
  %v481 = vmul.f32 %v97, %v408
  %v482 = vmul.f32 %v98, %v413
  %v483 = vmul.f32 %v99, %v418
  %v484 = vmul.f32 %v100, %v423
  %v485 = vmul.f32 %v101, %v428
  %v486 = vmul.f32 %v102, %v433
  %v487 = vmul.f32 %v103, %v438
  %v488 = vmul.f32 %v104, %v443
  %v489 = vmul.f32 %v105, %v448
  %v490 = vmul.f32 %v106, %v453
  %v491 = vmul.f32 %v107, %v458
  %v492 = vmul.f32 %v108, %v463
  %v493 = vmul.f32 %v109, %v468
  %v494 = vmul.f32 %v110, %v473
  %v495 = vmul.f32 %v111, %v478
  %497 = vset.pattern.permute.xlu0 1
  %498 = vperm.xlu0 %497, %v192
  %v499 = vpop.permute.xlu0 %498
  %502 = vset.pattern.permute.xlu0 1
  %503 = vperm.xlu0 %502, %v193
  %v504 = vpop.permute.xlu0 %503
  %507 = vset.pattern.permute.xlu0 1
  %508 = vperm.xlu0 %507, %v194
  %v509 = vpop.permute.xlu0 %508
  %512 = vset.pattern.permute.xlu0 1
  %513 = vperm.xlu0 %512, %v195
  %v514 = vpop.permute.xlu0 %513
  %517 = vset.pattern.permute.xlu0 1
  %518 = vperm.xlu0 %517, %v196
  %v519 = vpop.permute.xlu0 %518
  %522 = vset.pattern.permute.xlu0 1
  %523 = vperm.xlu0 %522, %v197
  %v524 = vpop.permute.xlu0 %523
  %527 = vset.pattern.permute.xlu0 1
  %528 = vperm.xlu0 %527, %v198
  %v529 = vpop.permute.xlu0 %528
  %532 = vset.pattern.permute.xlu0 1
  %533 = vperm.xlu0 %532, %v199
  %v534 = vpop.permute.xlu0 %533
  %537 = vset.pattern.permute.xlu0 1
  %538 = vperm.xlu0 %537, %v200
  %v539 = vpop.permute.xlu0 %538
  %542 = vset.pattern.permute.xlu0 1
  %543 = vperm.xlu0 %542, %v201
  %v544 = vpop.permute.xlu0 %543
  %547 = vset.pattern.permute.xlu0 1
  %548 = vperm.xlu0 %547, %v202
  %v549 = vpop.permute.xlu0 %548
  %552 = vset.pattern.permute.xlu0 1
  %553 = vperm.xlu0 %552, %v203
  %v554 = vpop.permute.xlu0 %553
  %557 = vset.pattern.permute.xlu0 1
  %558 = vperm.xlu0 %557, %v204
  %v559 = vpop.permute.xlu0 %558
  %562 = vset.pattern.permute.xlu0 1
  %563 = vperm.xlu0 %562, %v205
  %v564 = vpop.permute.xlu0 %563
  %567 = vset.pattern.permute.xlu0 1
  %568 = vperm.xlu0 %567, %v206
  %v569 = vpop.permute.xlu0 %568
  %572 = vset.pattern.permute.xlu0 1
  %573 = vperm.xlu0 %572, %v207
  %v574 = vpop.permute.xlu0 %573
  %v576 = vadd.f32 %v480, %v499
  %v577 = vadd.f32 %v481, %v504
  %v578 = vadd.f32 %v482, %v509
  %v579 = vadd.f32 %v483, %v514
  %v580 = vadd.f32 %v484, %v519
  %v581 = vadd.f32 %v485, %v524
  %v582 = vadd.f32 %v486, %v529
  %v583 = vadd.f32 %v487, %v534
  %v584 = vadd.f32 %v488, %v539
  %v585 = vadd.f32 %v489, %v544
  %v586 = vadd.f32 %v490, %v549
  %v587 = vadd.f32 %v491, %v554
  %v588 = vadd.f32 %v492, %v559
  %v589 = vadd.f32 %v493, %v564
  %v590 = vadd.f32 %v494, %v569
  %v591 = vadd.f32 %v495, %v574
  %v592 = vmax.f32 %v576, 0.0
  %v593 = vmax.f32 %v577, 0.0
  %v594 = vmax.f32 %v578, 0.0
  %v595 = vmax.f32 %v579, 0.0
  %v596 = vmax.f32 %v580, 0.0
  %v597 = vmax.f32 %v581, 0.0
  %v598 = vmax.f32 %v582, 0.0
  %v599 = vmax.f32 %v583, 0.0
  %v600 = vmax.f32 %v584, 0.0
  %v601 = vmax.f32 %v585, 0.0
  %v602 = vmax.f32 %v586, 0.0
  %v603 = vmax.f32 %v587, 0.0
  %v604 = vmax.f32 %v588, 0.0
  %v605 = vmax.f32 %v589, 0.0
  %v606 = vmax.f32 %v590, 0.0
  %v607 = vmax.f32 %v591, 0.0
  %v608 = vpack.c.bf16 %v592, %v592
  %v609 = vpack.c.bf16 %v593, %v593
  %v610 = vpack.c.bf16 %v594, %v594
  %v611 = vpack.c.bf16 %v595, %v595
  %v612 = vpack.c.bf16 %v596, %v596
  %v613 = vpack.c.bf16 %v597, %v597
  %v614 = vpack.c.bf16 %v598, %v598
  %v615 = vpack.c.bf16 %v599, %v599
  %v616 = vpack.c.bf16 %v600, %v600
  %v617 = vpack.c.bf16 %v601, %v601
  %v618 = vpack.c.bf16 %v602, %v602
  %v619 = vpack.c.bf16 %v603, %v603
  %v620 = vpack.c.bf16 %v604, %v604
  %v621 = vpack.c.bf16 %v605, %v605
  %v622 = vpack.c.bf16 %v606, %v606
  %v623 = vpack.c.bf16 %v607, %v607
  %v640 = vunpack.c.l.b16 %v608
  %v641 = vunpack.c.l.b16 %v609
  %v642 = vunpack.c.l.b16 %v610
  %v643 = vunpack.c.l.b16 %v611
  %v644 = vunpack.c.l.b16 %v612
  %v645 = vunpack.c.l.b16 %v613
  %v646 = vunpack.c.l.b16 %v614
  %v647 = vunpack.c.l.b16 %v615
  %v648 = vunpack.c.l.b16 %v616
  %v649 = vunpack.c.l.b16 %v617
  %v650 = vunpack.c.l.b16 %v618
  %v651 = vunpack.c.l.b16 %v619
  %v652 = vunpack.c.l.b16 %v620
  %v653 = vunpack.c.l.b16 %v621
  %v654 = vunpack.c.l.b16 %v622
  %v655 = vunpack.c.l.b16 %v623
  %v656 = vpack.c.b16 %v641, %v640
  %v657 = vpack.c.b16 %v643, %v642
  %v658 = vpack.c.b16 %v645, %v644
  %v659 = vpack.c.b16 %v647, %v646
  %v660 = vpack.c.b16 %v649, %v648
  %v661 = vpack.c.b16 %v651, %v650
  %v662 = vpack.c.b16 %v653, %v652
  %v663 = vpack.c.b16 %v655, %v654
  %664 = vrot.lane.b32.xlu0 %v656, 8
  %v665 = vpop.permute.xlu0 %664
  %666 = vrot.lane.b32.xlu0 %v657, 8
  %v667 = vpop.permute.xlu0 %666
  %668 = vrot.lane.b32.xlu0 %v658, 8
  %v669 = vpop.permute.xlu0 %668
  %670 = vrot.lane.b32.xlu0 %v659, 8
  %v671 = vpop.permute.xlu0 %670
  %672 = vrot.lane.b32.xlu0 %v660, 8
  %v673 = vpop.permute.xlu0 %672
  %674 = vrot.lane.b32.xlu0 %v661, 8
  %v675 = vpop.permute.xlu0 %674
  %676 = vrot.lane.b32.xlu0 %v662, 8
  %v677 = vpop.permute.xlu0 %676
  %678 = vrot.lane.b32.xlu0 %v663, 8
  %v679 = vpop.permute.xlu0 %678
  %vm680 = vcmask 64512
  %v683 = vsel %vm680, 0, %v665
  %v685 = vsel %vm680, 0, %v667
  %v687 = vsel %vm680, 0, %v669
  %v689 = vsel %vm680, 0, %v671
  %v691 = vsel %vm680, 0, %v673
  %v693 = vsel %vm680, 0, %v675
  %v695 = vsel %vm680, 0, %v677
  %v697 = vsel %vm680, 0, %v679
  %vm698 = vcmask 465920
  %v699 = vsel %vm698, %v683, 0
  %v701 = vsel %vm698, %v685, 0
  %v703 = vsel %vm698, %v687, 0
  %v705 = vsel %vm698, %v689, 0
  %v707 = vsel %vm698, %v691, 0
  %v709 = vsel %vm698, %v693, 0
  %v711 = vsel %vm698, %v695, 0
  %v713 = vsel %vm698, %v697, 0
  %v715 = vlaneseq
  %v716 = vand.u32 %v715, 127
  %vm717 = vcmp.ne.s32.totalorder %v716, 0
  %vm718 = vcmp.ne.s32.totalorder %v716, 6
  %vm719 = vcmp.ne.s32.totalorder %v716, 7
  %vm720 = vmand %vm717, %vm719
  %vm721 = vcmp.ne.s32.totalorder %v716, 13
  %vm722 = vmand %vm718, %vm721
  %vm723 = vcmp.ne.s32.totalorder %v716, 14
  %vm724 = vmand %vm720, %vm723
  %vm725 = vcmp.ne.s32.totalorder %v716, 20
  %vm726 = vmand %vm722, %vm725
  %vm727 = vcmp.ne.s32.totalorder %v716, 21
  %vm728 = vmand %vm724, %vm727
  %vm729 = vcmp.ne.s32.totalorder %v716, 27
  %vm730 = vmand %vm726, %vm729
  %vm731 = vcmp.ne.s32.totalorder %v716, 28
  %vm732 = vmand %vm728, %vm731
  %vm733 = vcmp.ne.s32.totalorder %v716, 34
  %vm734 = vmand %vm730, %vm733
  %vm735 = vcmp.ne.s32.totalorder %v716, 35
  %vm736 = vmand %vm732, %vm735
  %vm737 = vcmp.ne.s32.totalorder %v716, 41
  %vm738 = vmand %vm734, %vm737
  %vm739 = vcmp.ne.s32.totalorder %v716, 42
  %vm740 = vmand %vm736, %vm739
  %vm741 = vcmp.ne.s32.totalorder %v716, 48
  %vm742 = vmand %vm738, %vm741
  %v743 = vld [vmem:[%s2] sm:$0xf]
  %v744 = vld [vmem:[%s2 + $0x4] sm:$0xf]
  %v745 = vld [vmem:[%s2 + $0x8] sm:$0xf]
  %v746 = vld [vmem:[%s2 + $0xc] sm:$0xf]
  %v747 = vld [vmem:[%s2 + $0x10] sm:$0xf]
  %v748 = vld [vmem:[%s2 + $0x14] sm:$0xf]
  %v749 = vld [vmem:[%s2 + $0x18] sm:$0xf]
  %v750 = vld [vmem:[%s2 + $0x1c] sm:$0xf]
  %v751 = vld [vmem:[%s2 + $0x20] sm:$0xf]
  %v752 = vld [vmem:[%s2 + $0x24] sm:$0xf]
  %v753 = vld [vmem:[%s2 + $0x28] sm:$0xf]
  %v754 = vld [vmem:[%s2 + $0x2c] sm:$0xf]
  %v767 = vunpack.c.l.b16 %v743
  %v768 = vunpack.c.l.b16 %v744
  %v769 = vunpack.c.l.b16 %v745
  %v770 = vunpack.c.l.b16 %v746
  %v771 = vunpack.c.l.b16 %v747
  %v772 = vunpack.c.l.b16 %v748
  %v773 = vunpack.c.l.b16 %v749
  %v774 = vunpack.c.l.b16 %v750
  %v775 = vunpack.c.l.b16 %v751
  %v776 = vunpack.c.l.b16 %v752
  %v777 = vunpack.c.l.b16 %v753
  %v778 = vunpack.c.l.b16 %v754
  %v779 = vpack.c.b16 %v768, %v767
  %v780 = vpack.c.b16 %v770, %v769
  %v781 = vpack.c.b16 %v772, %v771
  %v782 = vpack.c.b16 %v774, %v773
  %v783 = vpack.c.b16 %v776, %v775
  %v784 = vpack.c.b16 %v778, %v777
  %791 = vmatpush.bf16.msra.mxu0 %v713
  %792 = vmatpush.bf16.msra.mxu0 %v711
  %793 = vmatpush.bf16.msra.mxu0 %v709
  %794 = vmatpush.bf16.msra.mxu0 %v707
  %795 = vmatpush.bf16.msra.mxu0 %v705
  %796 = vmatpush.bf16.msra.mxu0 %v703
  %797 = vmatpush.bf16.msra.mxu0 %v701
  %798 = vmatpush.bf16.msra.mxu0 %v699
  %799 = vmatmul.bf16.gmra.mxu0 %v779
  %v800 = vpop.f32.mrf.mxu0
  %v801 = vadd.f32 0.0, %v800
  %v802 = vpop.f32.mrf.mxu0
  %v803 = vadd.f32 0.0, %v802
  %804 = vmatmul.bf16.gmra.mxu0 %v780
  %v805 = vpop.f32.mrf.mxu0
  %v806 = vadd.f32 0.0, %v805
  %v807 = vpop.f32.mrf.mxu0
  %v808 = vadd.f32 0.0, %v807
  %809 = vmatmul.bf16.gmra.mxu0 %v781
  %v810 = vpop.f32.mrf.mxu0
  %v811 = vadd.f32 0.0, %v810
  %v812 = vpop.f32.mrf.mxu0
  %v813 = vadd.f32 0.0, %v812
  %814 = vmatmul.bf16.gmra.mxu0 %v782
  %v815 = vpop.f32.mrf.mxu0
  %v816 = vadd.f32 0.0, %v815
  %v817 = vpop.f32.mrf.mxu0
  %v818 = vadd.f32 0.0, %v817
  %819 = vmatmul.bf16.gmra.mxu0 %v783
  %v820 = vpop.f32.mrf.mxu0
  %v821 = vadd.f32 0.0, %v820
  %v822 = vpop.f32.mrf.mxu0
  %v823 = vadd.f32 0.0, %v822
  %824 = vmatmul.bf16.gmra.mxu0 %v784
  %v825 = vpop.f32.mrf.mxu0
  %v826 = vadd.f32 0.0, %v825
  %v827 = vpop.f32.mrf.mxu0
  %v828 = vadd.f32 0.0, %v827
  %829 = vdwg.mxu0
  %v830 = vsel %vm740, 1, 0
  %vm831 = vcmp.eq.s32.totalorder %v830, 1
  %v832 = vsel %vm831, %v801, 0.0
  %v833 = vsel %vm831, %v803, 0.0
  %v834 = vsel %vm831, %v806, 0.0
  %v835 = vsel %vm831, %v808, 0.0
  %840 = vrot.lane.b32.xlu0 %v811, 127
  %v841 = vpop.permute.xlu0 %840
  %842 = vrot.lane.b32.xlu0 %v813, 127
  %v843 = vpop.permute.xlu0 %842
  %844 = vrot.lane.b32.xlu0 %v816, 127
  %v845 = vpop.permute.xlu0 %844
  %846 = vrot.lane.b32.xlu0 %v818, 127
  %v847 = vpop.permute.xlu0 %846
  %v852 = vadd.f32 %v832, %v841
  %v853 = vadd.f32 %v833, %v843
  %v854 = vadd.f32 %v834, %v845
  %v855 = vadd.f32 %v835, %v847
  %v856 = vsel %vm742, 1, 0
  %vm857 = vcmp.eq.s32.totalorder %v856, 1
  %862 = vrot.lane.b32.xlu0 %v821, 126
  %v863 = vpop.permute.xlu0 %862
  %864 = vrot.lane.b32.xlu0 %v823, 126
  %v865 = vpop.permute.xlu0 %864
  %866 = vrot.lane.b32.xlu0 %v826, 126
  %v867 = vpop.permute.xlu0 %866
  %868 = vrot.lane.b32.xlu0 %v828, 126
  %v869 = vpop.permute.xlu0 %868
  %v874 = vsel %vm857, %v863, 0.0
  %v875 = vsel %vm857, %v865, 0.0
  %v876 = vsel %vm857, %v867, 0.0
  %v877 = vsel %vm857, %v869, 0.0
  %v878 = vadd.f32 %v852, %v874
  %v879 = vadd.f32 %v853, %v875
  %v880 = vadd.f32 %v854, %v876
  %v881 = vadd.f32 %v855, %v877
  %v882 = vld [vmem:[%s2 + $0x30] sm:$0xf]
  %v883 = vld [vmem:[%s2 + $0x34] sm:$0xf]
  %v884 = vld [vmem:[%s2 + $0x38] sm:$0xf]
  %v885 = vld [vmem:[%s2 + $0x3c] sm:$0xf]
  %v886 = vld [vmem:[%s2 + $0x40] sm:$0xf]
  %v887 = vld [vmem:[%s2 + $0x44] sm:$0xf]
  %v888 = vld [vmem:[%s2 + $0x48] sm:$0xf]
  %v889 = vld [vmem:[%s2 + $0x4c] sm:$0xf]
  %v890 = vld [vmem:[%s2 + $0x50] sm:$0xf]
  %v891 = vld [vmem:[%s2 + $0x54] sm:$0xf]
  %v892 = vld [vmem:[%s2 + $0x58] sm:$0xf]
  %v893 = vld [vmem:[%s2 + $0x5c] sm:$0xf]
  %v906 = vunpack.c.l.b16 %v882
  %v907 = vunpack.c.l.b16 %v883
  %v908 = vunpack.c.l.b16 %v884
  %v909 = vunpack.c.l.b16 %v885
  %v910 = vunpack.c.l.b16 %v886
  %v911 = vunpack.c.l.b16 %v887
  %v912 = vunpack.c.l.b16 %v888
  %v913 = vunpack.c.l.b16 %v889
  %v914 = vunpack.c.l.b16 %v890
  %v915 = vunpack.c.l.b16 %v891
  %v916 = vunpack.c.l.b16 %v892
  %v917 = vunpack.c.l.b16 %v893
  %v918 = vpack.c.b16 %v907, %v906
  %v919 = vpack.c.b16 %v909, %v908
  %v920 = vpack.c.b16 %v911, %v910
  %v921 = vpack.c.b16 %v913, %v912
  %v922 = vpack.c.b16 %v915, %v914
  %v923 = vpack.c.b16 %v917, %v916
  %930 = vmatpush.bf16.msra.mxu0 %v713
  %931 = vmatpush.bf16.msra.mxu0 %v711
  %932 = vmatpush.bf16.msra.mxu0 %v709
  %933 = vmatpush.bf16.msra.mxu0 %v707
  %934 = vmatpush.bf16.msra.mxu0 %v705
  %935 = vmatpush.bf16.msra.mxu0 %v703
  %936 = vmatpush.bf16.msra.mxu0 %v701
  %937 = vmatpush.bf16.msra.mxu0 %v699
  %938 = vmatmul.bf16.gmra.mxu0 %v918
  %v939 = vpop.f32.mrf.mxu0
  %v940 = vadd.f32 0.0, %v939
  %v941 = vpop.f32.mrf.mxu0
  %v942 = vadd.f32 0.0, %v941
  %943 = vmatmul.bf16.gmra.mxu0 %v919
  %v944 = vpop.f32.mrf.mxu0
  %v945 = vadd.f32 0.0, %v944
  %v946 = vpop.f32.mrf.mxu0
  %v947 = vadd.f32 0.0, %v946
  %948 = vmatmul.bf16.gmra.mxu0 %v920
  %v949 = vpop.f32.mrf.mxu0
  %v950 = vadd.f32 0.0, %v949
  %v951 = vpop.f32.mrf.mxu0
  %v952 = vadd.f32 0.0, %v951
  %953 = vmatmul.bf16.gmra.mxu0 %v921
  %v954 = vpop.f32.mrf.mxu0
  %v955 = vadd.f32 0.0, %v954
  %v956 = vpop.f32.mrf.mxu0
  %v957 = vadd.f32 0.0, %v956
  %958 = vmatmul.bf16.gmra.mxu0 %v922
  %v959 = vpop.f32.mrf.mxu0
  %v960 = vadd.f32 0.0, %v959
  %v961 = vpop.f32.mrf.mxu0
  %v962 = vadd.f32 0.0, %v961
  %963 = vmatmul.bf16.gmra.mxu0 %v923
  %v964 = vpop.f32.mrf.mxu0
  %v965 = vadd.f32 0.0, %v964
  %v966 = vpop.f32.mrf.mxu0
  %v967 = vadd.f32 0.0, %v966
  %968 = vdwg.mxu0
  %973 = vrot.lane.b32.xlu0 %v940, 121
  %v974 = vpop.permute.xlu0 %973
  %975 = vrot.lane.b32.xlu0 %v942, 121
  %v976 = vpop.permute.xlu0 %975
  %977 = vrot.lane.b32.xlu0 %v945, 121
  %v978 = vpop.permute.xlu0 %977
  %979 = vrot.lane.b32.xlu0 %v947, 121
  %v980 = vpop.permute.xlu0 %979
  %v985 = vsel %vm831, %v974, 0.0
  %v986 = vsel %vm831, %v976, 0.0
  %v987 = vsel %vm831, %v978, 0.0
  %v988 = vsel %vm831, %v980, 0.0
  %v989 = vadd.f32 %v878, %v985
  %v990 = vadd.f32 %v879, %v986
  %v991 = vadd.f32 %v880, %v987
  %v992 = vadd.f32 %v881, %v988
  %997 = vrot.lane.b32.xlu0 %v950, 120
  %v998 = vpop.permute.xlu0 %997
  %999 = vrot.lane.b32.xlu0 %v952, 120
  %v1000 = vpop.permute.xlu0 %999
  %1001 = vrot.lane.b32.xlu0 %v955, 120
  %v1002 = vpop.permute.xlu0 %1001
  %1003 = vrot.lane.b32.xlu0 %v957, 120
  %v1004 = vpop.permute.xlu0 %1003
  %v1009 = vadd.f32 %v989, %v998
  %v1010 = vadd.f32 %v990, %v1000
  %v1011 = vadd.f32 %v991, %v1002
  %v1012 = vadd.f32 %v992, %v1004
  %1017 = vrot.lane.b32.xlu0 %v960, 119
  %v1018 = vpop.permute.xlu0 %1017
  %1019 = vrot.lane.b32.xlu0 %v962, 119
  %v1020 = vpop.permute.xlu0 %1019
  %1021 = vrot.lane.b32.xlu0 %v965, 119
  %v1022 = vpop.permute.xlu0 %1021
  %1023 = vrot.lane.b32.xlu0 %v967, 119
  %v1024 = vpop.permute.xlu0 %1023
  %v1029 = vsel %vm857, %v1018, 0.0
  %v1030 = vsel %vm857, %v1020, 0.0
  %v1031 = vsel %vm857, %v1022, 0.0
  %v1032 = vsel %vm857, %v1024, 0.0
  %v1033 = vadd.f32 %v1009, %v1029
  %v1034 = vadd.f32 %v1010, %v1030
  %v1035 = vadd.f32 %v1011, %v1031
  %v1036 = vadd.f32 %v1012, %v1032
  %v1037 = vld [vmem:[%s2 + $0x60] sm:$0xf]
  %v1038 = vld [vmem:[%s2 + $0x64] sm:$0xf]
  %v1039 = vld [vmem:[%s2 + $0x68] sm:$0xf]
  %v1040 = vld [vmem:[%s2 + $0x6c] sm:$0xf]
  %v1041 = vld [vmem:[%s2 + $0x70] sm:$0xf]
  %v1042 = vld [vmem:[%s2 + $0x74] sm:$0xf]
  %v1043 = vld [vmem:[%s2 + $0x78] sm:$0xf]
  %v1044 = vld [vmem:[%s2 + $0x7c] sm:$0xf]
  %v1045 = vld [vmem:[%s2 + $0x80] sm:$0xf]
  %v1046 = vld [vmem:[%s2 + $0x84] sm:$0xf]
  %v1047 = vld [vmem:[%s2 + $0x88] sm:$0xf]
  %v1048 = vld [vmem:[%s2 + $0x8c] sm:$0xf]
  %v1061 = vunpack.c.l.b16 %v1037
  %v1062 = vunpack.c.l.b16 %v1038
  %v1063 = vunpack.c.l.b16 %v1039
  %v1064 = vunpack.c.l.b16 %v1040
  %v1065 = vunpack.c.l.b16 %v1041
  %v1066 = vunpack.c.l.b16 %v1042
  %v1067 = vunpack.c.l.b16 %v1043
  %v1068 = vunpack.c.l.b16 %v1044
  %v1069 = vunpack.c.l.b16 %v1045
  %v1070 = vunpack.c.l.b16 %v1046
  %v1071 = vunpack.c.l.b16 %v1047
  %v1072 = vunpack.c.l.b16 %v1048
  %v1073 = vpack.c.b16 %v1062, %v1061
  %v1074 = vpack.c.b16 %v1064, %v1063
  %v1075 = vpack.c.b16 %v1066, %v1065
  %v1076 = vpack.c.b16 %v1068, %v1067
  %v1077 = vpack.c.b16 %v1070, %v1069
  %v1078 = vpack.c.b16 %v1072, %v1071
  %1085 = vmatpush.bf16.msra.mxu0 %v713
  %1086 = vmatpush.bf16.msra.mxu0 %v711
  %1087 = vmatpush.bf16.msra.mxu0 %v709
  %1088 = vmatpush.bf16.msra.mxu0 %v707
  %1089 = vmatpush.bf16.msra.mxu0 %v705
  %1090 = vmatpush.bf16.msra.mxu0 %v703
  %1091 = vmatpush.bf16.msra.mxu0 %v701
  %1092 = vmatpush.bf16.msra.mxu0 %v699
  %1093 = vmatmul.bf16.gmra.mxu0 %v1073
  %v1094 = vpop.f32.mrf.mxu0
  %v1095 = vadd.f32 0.0, %v1094
  %v1096 = vpop.f32.mrf.mxu0
  %v1097 = vadd.f32 0.0, %v1096
  %1098 = vmatmul.bf16.gmra.mxu0 %v1074
  %v1099 = vpop.f32.mrf.mxu0
  %v1100 = vadd.f32 0.0, %v1099
  %v1101 = vpop.f32.mrf.mxu0
  %v1102 = vadd.f32 0.0, %v1101
  %1103 = vmatmul.bf16.gmra.mxu0 %v1075
  %v1104 = vpop.f32.mrf.mxu0
  %v1105 = vadd.f32 0.0, %v1104
  %v1106 = vpop.f32.mrf.mxu0
  %v1107 = vadd.f32 0.0, %v1106
  %1108 = vmatmul.bf16.gmra.mxu0 %v1076
  %v1109 = vpop.f32.mrf.mxu0
  %v1110 = vadd.f32 0.0, %v1109
  %v1111 = vpop.f32.mrf.mxu0
  %v1112 = vadd.f32 0.0, %v1111
  %1113 = vmatmul.bf16.gmra.mxu0 %v1077
  %v1114 = vpop.f32.mrf.mxu0
  %v1115 = vadd.f32 0.0, %v1114
  %v1116 = vpop.f32.mrf.mxu0
  %v1117 = vadd.f32 0.0, %v1116
  %1118 = vmatmul.bf16.gmra.mxu0 %v1078
  %v1119 = vpop.f32.mrf.mxu0
  %v1120 = vadd.f32 0.0, %v1119
  %v1121 = vpop.f32.mrf.mxu0
  %v1122 = vadd.f32 0.0, %v1121
  %1123 = vdwg.mxu0
  %1128 = vrot.lane.b32.xlu0 %v1095, 114
  %v1129 = vpop.permute.xlu0 %1128
  %1130 = vrot.lane.b32.xlu0 %v1097, 114
  %v1131 = vpop.permute.xlu0 %1130
  %1132 = vrot.lane.b32.xlu0 %v1100, 114
  %v1133 = vpop.permute.xlu0 %1132
  %1134 = vrot.lane.b32.xlu0 %v1102, 114
  %v1135 = vpop.permute.xlu0 %1134
  %v1140 = vsel %vm831, %v1129, 0.0
  %v1141 = vsel %vm831, %v1131, 0.0
  %v1142 = vsel %vm831, %v1133, 0.0
  %v1143 = vsel %vm831, %v1135, 0.0
  %v1144 = vadd.f32 %v1033, %v1140
  %v1145 = vadd.f32 %v1034, %v1141
  %v1146 = vadd.f32 %v1035, %v1142
  %v1147 = vadd.f32 %v1036, %v1143
  %1152 = vrot.lane.b32.xlu0 %v1105, 113
  %v1153 = vpop.permute.xlu0 %1152
  %1154 = vrot.lane.b32.xlu0 %v1107, 113
  %v1155 = vpop.permute.xlu0 %1154
  %1156 = vrot.lane.b32.xlu0 %v1110, 113
  %v1157 = vpop.permute.xlu0 %1156
  %1158 = vrot.lane.b32.xlu0 %v1112, 113
  %v1159 = vpop.permute.xlu0 %1158
  %v1164 = vadd.f32 %v1144, %v1153
  %v1165 = vadd.f32 %v1145, %v1155
  %v1166 = vadd.f32 %v1146, %v1157
  %v1167 = vadd.f32 %v1147, %v1159
  %1172 = vrot.lane.b32.xlu0 %v1115, 112
  %v1173 = vpop.permute.xlu0 %1172
  %1174 = vrot.lane.b32.xlu0 %v1117, 112
  %v1175 = vpop.permute.xlu0 %1174
  %1176 = vrot.lane.b32.xlu0 %v1120, 112
  %v1177 = vpop.permute.xlu0 %1176
  %1178 = vrot.lane.b32.xlu0 %v1122, 112
  %v1179 = vpop.permute.xlu0 %1178
  %v1184 = vsel %vm857, %v1173, 0.0
  %v1185 = vsel %vm857, %v1175, 0.0
  %v1186 = vsel %vm857, %v1177, 0.0
  %v1187 = vsel %vm857, %v1179, 0.0
  %v1188 = vadd.f32 %v1164, %v1184
  %v1189 = vadd.f32 %v1165, %v1185
  %v1190 = vadd.f32 %v1166, %v1186
  %v1191 = vadd.f32 %v1167, %v1187
  %1192 = vst.msk [vmem:[%s3] sm:$0xff] %vm31, %v1188
  %1193 = vst.msk [vmem:[%s3 + $0x8] sm:$0xff] %vm31, %v1189
  %1194 = vst.msk [vmem:[%s3 + $0x10] sm:$0xff] %vm31, %v1190
  %1195 = vst.msk [vmem:[%s3 + $0x18] sm:$0xff] %vm31, %v1191
  // Predicated region
  $region14: #{bn_relu_conv.1} parent=0 // pred_check
    _
  $region15: #{bn_relu_conv.1} parent=0 // pred_check_branch
    %1197 = sbr.rel (0) target = $region17
  $region16: #{bn_relu_conv.1} parent=0 // pred_region
    _
  $region17: #{bn_relu_conv.1} parent=0 // pred_fallthru
    _
  // Predicated region
  $region18: #{bn_relu_conv.1} parent=0 // pred_check
    _
  $region19: #{bn_relu_conv.1} parent=0 // pred_check_branch
    %1199 = sbr.rel (0) target = $region21
  $region20: #{bn_relu_conv.1} parent=0 // pred_region
    _
  $region21: #{bn_relu_conv.1} parent=0 // pred_fallthru
    _

</llo_original>
